<compile_context>
chip_gen: v6e
topology: v6e:2x2x1
jax: 0.10.0
libtpu: 0.0.40
codegen_flags: <defaults>
</compile_context>

<pallas_src>
import functools

import jax
import jax.numpy as jnp
from jax.experimental import pallas as pl
from jax.experimental.pallas import tpu as pltpu


_TR_MAX = 2048  # rows (of 128 lanes) per chunk: 1 MiB f32 / 512 KiB bf16 per block


def _cdiv(a, b):
    return (a + b - 1) // b


def _round_up(a, m):
    return _cdiv(a, m) * m


def _pmd_chunk_kernel(x_ref, t_ref, out_ref, acc_sum, acc_cnt, *, rows_total):
    # x_ref / t_ref: (TR, 128) chunk of one flattened sample (batch dim squeezed).
    # out_ref: (8, 128) packed result tile for this sample
    #          (sublane 0 = masked sum of -log(iou), sublane 1 = masked count).
    # acc_sum / acc_cnt: (8, 128) f32 VMEM accumulators, resident across chunks.
    k = pl.program_id(1)
    nk = pl.num_programs(1)
    tr = x_ref.shape[0]

    @pl.when(k == 0)
    def _():
        acc_sum[...] = jnp.zeros_like(acc_sum)
        acc_cnt[...] = jnp.zeros_like(acc_cnt)

    x = x_ref[...].astype(jnp.float32)
    t = t_ref[...].astype(jnp.float32)

    # target_positive_location: positives -> 1, non-positives keep their value.
    pos = jnp.where(t > 0.0, jnp.float32(1.0), t)
    xi = x * pos

    rmin = jnp.minimum(xi, t) + jnp.float32(0.001)
    rmax = jnp.maximum(xi, t) + jnp.float32(0.001)
    iou = rmin / rmax

    mask = iou < 1.0
    # Ragged final chunk: rows past the true row count hold unspecified data.
    if rows_total % tr != 0:  # static specialization; skipped when exact fit
        row_ids = k * tr + jax.lax.broadcasted_iota(jnp.int32, (tr, 128), 0)
        mask = mask & (row_ids < rows_total)

    vals = jnp.where(mask, -jnp.log(iou), jnp.float32(0.0))
    cnts = jnp.where(mask, jnp.float32(1.0), jnp.float32(0.0))

    # Reduce (TR, 128) -> (8, 128) with tile-aligned vreg-wise VPU adds only;
    # the expensive cross-lane/sublane reduce happens once, in the epilogue.
    acc_sum[...] += jnp.sum(vals.reshape(tr // 8, 8, 128), axis=0)
    acc_cnt[...] += jnp.sum(cnts.reshape(tr // 8, 8, 128), axis=0)

    @pl.when(k == nk - 1)
    def _():
        s = jnp.sum(acc_sum[...])
        c = jnp.sum(acc_cnt[...])
        row = jax.lax.broadcasted_iota(jnp.int32, out_ref.shape, 0)
        out_ref[...] = jnp.where(
            row == 0, s, jnp.where(row == 1, c, jnp.float32(0.0))
        )


@functools.partial(jax.jit, static_argnames=("loss_weight",))
def pmd_loss_pallas(inp, target, loss_weight=1.0):
    B = inp.shape[0]
    x = inp.reshape(B, -1)
    t = target.reshape(B, -1)
    # Keep f32 / bf16 as-is (kernel upcasts); only cast exotic dtypes.
    if x.dtype not in (jnp.float32, jnp.bfloat16):
        x = x.astype(jnp.float32)
    if t.dtype not in (jnp.float32, jnp.bfloat16):
        t = t.astype(jnp.float32)
    n = x.shape[1]

    # Choose chunk size (rows of 128 lanes).  Large samples: fixed TR_MAX rows,
    # ragged tail masked in-kernel.  Small samples: one chunk, rounded to an
    # 8-row multiple (cheap pad, keeps the reshape-to-(.,8,128) tile aligned).
    r_lanes = _cdiv(n, 128)
    if r_lanes >= _TR_MAX:
        tr = _TR_MAX
        r = r_lanes
    else:
        tr = max(8, _round_up(r_lanes, 8))
        r = tr
    pad = r * 128 - n
    if pad:
        # Zero pad is inert: input == target == 0 gives iou == 1, excluded by
        # the `iou < 1` mask exactly as in the torch code.
        x = jnp.pad(x, ((0, 0), (0, pad)))
        t = jnp.pad(t, ((0, 0), (0, pad)))
    x3 = x.reshape(B, r, 128)
    t3 = t.reshape(B, r, 128)
    num_chunks = _cdiv(r, tr)

    kernel = functools.partial(_pmd_chunk_kernel, rows_total=r)

    out = pl.pallas_call(
        kernel,
        grid=(B, num_chunks),
        in_specs=[
            pl.BlockSpec((None, tr, 128), lambda b, k: (b, k, 0)),
            pl.BlockSpec((None, tr, 128), lambda b, k: (b, k, 0)),
        ],
        out_specs=pl.BlockSpec((None, 8, 128), lambda b, k: (b, 0, 0)),
        out_shape=jax.ShapeDtypeStruct((B, 8, 128), jnp.float32),
        scratch_shapes=[
            pltpu.VMEM((8, 128), jnp.float32),
            pltpu.VMEM((8, 128), jnp.float32),
        ],
        compiler_params=pltpu.CompilerParams(
            dimension_semantics=("parallel", "arbitrary"),
        ),
        cost_estimate=pl.CostEstimate(
            flops=12 * B * r * 128,
            transcendentals=2 * B * r * 128,
            bytes_accessed=B * r * 128 * (x3.dtype.itemsize + t3.dtype.itemsize)
            + B * 8 * 128 * 4,
        ),
    )(x3, t3)

    per_batch_sum = out[:, 0, 0]
    per_batch_cnt = out[:, 1, 0]

    valid = per_batch_cnt > 0.0
    per_batch_mean = jnp.where(
        valid, per_batch_sum / jnp.maximum(per_batch_cnt, 1.0), 0.0
    )
    n_valid = jnp.sum(valid.astype(jnp.float32))
    # If no batch contributes, torch returns mean([target.mean()*0]) == 0.
    loss = jnp.where(n_valid > 0.0, jnp.sum(per_batch_mean) / n_valid, 0.0)
    return jnp.float32(loss_weight) * loss


def pmd_loss_ref(inp, target, loss_weight=1.0):
    """Pure-JAX reference mirroring the PyTorch forward (reduce=True)."""
    B = inp.shape[0]
    x = inp.reshape(B, -1).astype(jnp.float32)
    t = target.reshape(B, -1).astype(jnp.float32)
    pos = jnp.where(t > 0.0, 1.0, t)
    xi = x * pos
    rmin = jnp.minimum(xi, t) + 0.001
    rmax = jnp.maximum(xi, t) + 0.001
    iou = rmin / rmax
    mask = iou < 1.0
    s = jnp.sum(jnp.where(mask, jnp.log(1.0 / iou), 0.0), axis=1)
    c = jnp.sum(mask.astype(jnp.float32), axis=1)
    valid = c > 0.0
    pb = jnp.where(valid, s / jnp.maximum(c, 1.0), 0.0)
    nv = jnp.sum(valid.astype(jnp.float32))
    return jnp.float32(loss_weight) * jnp.where(
        nv > 0.0, jnp.sum(pb) / nv, 0.0
    )


if __name__ == "__main__":
    key = jax.random.PRNGKey(0)
    k_in, k_tgt = jax.random.split(key)

    B, C, H, W = 2, 4, 16, 16
    # "input" is a prediction map in [0, 1); "target" is a binary mask.
    inp = jax.random.uniform(k_in, (B, C, H, W), dtype=jnp.float32)
    target = (
        jax.random.uniform(k_tgt, (B, C, H, W), dtype=jnp.float32) > 0.5
    ).astype(jnp.float32)

    loss = pmd_loss_pallas(inp, target, loss_weight=1.0)
    jax.block_until_ready(loss)

    ref = pmd_loss_ref(inp, target, loss_weight=1.0)
    assert jnp.allclose(loss, ref, rtol=1e-5, atol=1e-5), (loss, ref)

    print("KERNEL_OK")
</pallas_src>

<mosaic_0001>
module attributes {stable_mosaic.version = 11 : i64} {
  func.func @_pmd_chunk_kernel(%arg0: i32, %arg1: i32, %arg2: memref<1x8x128xf32, #tpu.memory_space<vmem>>, %arg3: memref<1x8x128xf32, #tpu.memory_space<vmem>>, %arg4: memref<1x8x128xf32, #tpu.memory_space<vmem>>, %arg5: memref<8x128xf32, #tpu.memory_space<vmem>>, %arg6: memref<8x128xf32, #tpu.memory_space<vmem>>) attributes {dimension_semantics = [#tpu.dimension_semantics<parallel>, #tpu.dimension_semantics<arbitrary>], iteration_bounds = array<i64: 2, 1>, scalar_prefetch = 0 : i64, scratch_operands = 2 : i64, tpu.core_type = #tpu.core_type<tc>, window_params = [{transform_indices = @transform_0, window_bounds = array<i64: 1, 8, 128>}, {transform_indices = @transform_1, window_bounds = array<i64: 1, 8, 128>}, {transform_indices = @transform_2, window_bounds = array<i64: 1, 8, 128>}]} {
    %c0_i32 = arith.constant 0 : i32
    %0 = arith.cmpi eq, %arg1, %c0_i32 : i32
    %1 = arith.extui %0 : i1 to i32
    %c0_i32_0 = arith.constant 0 : i32
    %2 = arith.cmpi ne, %1, %c0_i32_0 : i32
    scf.if %2 {
      %cst_26 = arith.constant 0.000000e+00 : f32
      %42 = vector.broadcast %cst_26 : f32 to vector<8x128xf32>
      %c0_27 = arith.constant 0 : index
      %c0_28 = arith.constant 0 : index
      %43 = vector.load %arg5[%c0_27, %c0_28] : memref<8x128xf32, #tpu.memory_space<vmem>>, vector<8x128xf32>
      tpu.vector_store %arg5[%c0_27, %c0_28], %42 {strides = array<i32>} : memref<8x128xf32, #tpu.memory_space<vmem>>, vector<8x128xf32>,
      %cst_29 = arith.constant 0.000000e+00 : f32
      %44 = vector.broadcast %cst_29 : f32 to vector<8x128xf32>
      %c0_30 = arith.constant 0 : index
      %c0_31 = arith.constant 0 : index
      %45 = vector.load %arg6[%c0_30, %c0_31] : memref<8x128xf32, #tpu.memory_space<vmem>>, vector<8x128xf32>
      tpu.vector_store %arg6[%c0_30, %c0_31], %44 {strides = array<i32>} : memref<8x128xf32, #tpu.memory_space<vmem>>, vector<8x128xf32>,
    } else {
    }
    %c0 = arith.constant 0 : index
    %c0_1 = arith.constant 0 : index
    %c0_2 = arith.constant 0 : index
    %3 = vector.load %arg2[%c0, %c0_1, %c0_2] : memref<1x8x128xf32, #tpu.memory_space<vmem>>, vector<1x8x128xf32>
    %4 = vector.shape_cast %3 : vector<1x8x128xf32> to vector<8x128xf32>
    %c0_3 = arith.constant 0 : index
    %c0_4 = arith.constant 0 : index
    %c0_5 = arith.constant 0 : index
    %5 = vector.load %arg3[%c0_3, %c0_4, %c0_5] : memref<1x8x128xf32, #tpu.memory_space<vmem>>, vector<1x8x128xf32>
    %6 = vector.shape_cast %5 : vector<1x8x128xf32> to vector<8x128xf32>
    %cst = arith.constant 0.000000e+00 : f32
    %7 = vector.broadcast %cst : f32 to vector<8x128xf32>
    %8 = arith.cmpf ogt, %6, %7 : vector<8x128xf32>
    %cst_6 = arith.constant 1.000000e+00 : f32
    %9 = vector.broadcast %cst_6 : f32 to vector<8x128xf32>
    %10 = arith.select %8, %9, %6 : vector<8x128xi1>, vector<8x128xf32>
    %11 = arith.mulf %4, %10 : vector<8x128xf32>
    %12 = arith.minimumf %11, %6 : vector<8x128xf32>
    %cst_7 = arith.constant 1.000000e-03 : f32
    %13 = vector.broadcast %cst_7 : f32 to vector<8x128xf32>
    %14 = arith.addf %12, %13 : vector<8x128xf32>
    %15 = arith.maximumf %11, %6 : vector<8x128xf32>
    %cst_8 = arith.constant 1.000000e-03 : f32
    %16 = vector.broadcast %cst_8 : f32 to vector<8x128xf32>
    %17 = arith.addf %15, %16 : vector<8x128xf32>
    %18 = arith.divf %14, %17 : vector<8x128xf32>
    %cst_9 = arith.constant 1.000000e+00 : f32
    %19 = vector.broadcast %cst_9 : f32 to vector<8x128xf32>
    %20 = arith.cmpf olt, %18, %19 : vector<8x128xf32>
    %21 = math.log %18 : vector<8x128xf32>
    %cst_10 = arith.constant 0.000000e+00 : f32
    %22 = vector.broadcast %cst_10 : f32 to vector<8x128xf32>
    %23 = arith.subf %22, %21 : vector<8x128xf32>
    %cst_11 = arith.constant 0.000000e+00 : f32
    %24 = vector.broadcast %cst_11 : f32 to vector<8x128xf32>
    %25 = arith.select %20, %23, %24 : vector<8x128xi1>, vector<8x128xf32>
    %cst_12 = arith.constant 1.000000e+00 : f32
    %cst_13 = arith.constant 0.000000e+00 : f32
    %26 = vector.broadcast %cst_12 : f32 to vector<8x128xf32>
    %27 = vector.broadcast %cst_13 : f32 to vector<8x128xf32>
    %28 = arith.select %20, %26, %27 : vector<8x128xi1>, vector<8x128xf32>
    %c0_14 = arith.constant 0 : index
    %c0_15 = arith.constant 0 : index
    %29 = vector.load %arg5[%c0_14, %c0_15] : memref<8x128xf32, #tpu.memory_space<vmem>>, vector<8x128xf32>
    %30 = vector.shape_cast %25 : vector<8x128xf32> to vector<1x8x128xf32>
    %cst_16 = arith.constant dense<0.000000e+00> : vector<8x128xf32>
    %31 = vector.multi_reduction <add>, %30, %cst_16 [0] : vector<1x8x128xf32> to vector<8x128xf32>
    %32 = arith.addf %29, %31 : vector<8x128xf32>
    %c0_17 = arith.constant 0 : index
    %c0_18 = arith.constant 0 : index
    %33 = vector.load %arg5[%c0_17, %c0_18] : memref<8x128xf32, #tpu.memory_space<vmem>>, vector<8x128xf32>
    tpu.vector_store %arg5[%c0_17, %c0_18], %32 {strides = array<i32>} : memref<8x128xf32, #tpu.memory_space<vmem>>, vector<8x128xf32>,
    %c0_19 = arith.constant 0 : index
    %c0_20 = arith.constant 0 : index
    %34 = vector.load %arg6[%c0_19, %c0_20] : memref<8x128xf32, #tpu.memory_space<vmem>>, vector<8x128xf32>
    %35 = vector.shape_cast %28 : vector<8x128xf32> to vector<1x8x128xf32>
    %cst_21 = arith.constant dense<0.000000e+00> : vector<8x128xf32>
    %36 = vector.multi_reduction <add>, %35, %cst_21 [0] : vector<1x8x128xf32> to vector<8x128xf32>
    %37 = arith.addf %34, %36 : vector<8x128xf32>
    %c0_22 = arith.constant 0 : index
    %c0_23 = arith.constant 0 : index
    %38 = vector.load %arg6[%c0_22, %c0_23] : memref<8x128xf32, #tpu.memory_space<vmem>>, vector<8x128xf32>
    tpu.vector_store %arg6[%c0_22, %c0_23], %37 {strides = array<i32>} : memref<8x128xf32, #tpu.memory_space<vmem>>, vector<8x128xf32>,
    %c0_i32_24 = arith.constant 0 : i32
    %39 = arith.cmpi eq, %arg1, %c0_i32_24 : i32
    %40 = arith.extui %39 : i1 to i32
    %c0_i32_25 = arith.constant 0 : i32
    %41 = arith.cmpi ne, %40, %c0_i32_25 : i32
    scf.if %41 {
      %c0_26 = arith.constant 0 : index
      %c0_27 = arith.constant 0 : index
      %42 = vector.load %arg5[%c0_26, %c0_27] : memref<8x128xf32, #tpu.memory_space<vmem>>, vector<8x128xf32>
      %43 = vector.shape_cast %42 : vector<8x128xf32> to vector<1x8x128xf32>
      %cst_28 = arith.constant dense<0.000000e+00> : vector<1xf32>
      %44 = vector.multi_reduction <add>, %43, %cst_28 [1, 2] : vector<1x8x128xf32> to vector<1xf32>
      %45 = vector.shape_cast %44 : vector<1xf32> to vector<1x1x1xf32>
      %46 = vector.extract %45[0, 0, 0] : f32 from vector<1x1x1xf32>
      %c0_29 = arith.constant 0 : index
      %c0_30 = arith.constant 0 : index
      %47 = vector.load %arg6[%c0_29, %c0_30] : memref<8x128xf32, #tpu.memory_space<vmem>>, vector<8x128xf32>
      %48 = vector.shape_cast %47 : vector<8x128xf32> to vector<1x8x128xf32>
      %cst_31 = arith.constant dense<0.000000e+00> : vector<1xf32>
      %49 = vector.multi_reduction <add>, %48, %cst_31 [1, 2] : vector<1x8x128xf32> to vector<1xf32>
      %50 = vector.shape_cast %49 : vector<1xf32> to vector<1x1x1xf32>
      %51 = vector.extract %50[0, 0, 0] : f32 from vector<1x1x1xf32>
      %52 = tpu.iota {dimensions = array<i32: 0>} : vector<8x128xi32>
      %c0_i32_32 = arith.constant 0 : i32
      %53 = vector.broadcast %c0_i32_32 : i32 to vector<8x128xi32>
      %54 = arith.cmpi eq, %52, %53 : vector<8x128xi32>
      %c1_i32 = arith.constant 1 : i32
      %55 = vector.broadcast %c1_i32 : i32 to vector<8x128xi32>
      %56 = arith.cmpi eq, %52, %55 : vector<8x128xi32>
      %cst_33 = arith.constant 0.000000e+00 : f32
      %57 = vector.broadcast %51 : f32 to vector<8x128xf32>
      %58 = vector.broadcast %cst_33 : f32 to vector<8x128xf32>
      %59 = arith.select %56, %57, %58 : vector<8x128xi1>, vector<8x128xf32>
      %60 = vector.broadcast %46 : f32 to vector<8x128xf32>
      %61 = arith.select %54, %60, %59 : vector<8x128xi1>, vector<8x128xf32>
      %c0_34 = arith.constant 0 : index
      %c0_35 = arith.constant 0 : index
      %c0_36 = arith.constant 0 : index
      %62 = vector.load %arg4[%c0_34, %c0_35, %c0_36] : memref<1x8x128xf32, #tpu.memory_space<vmem>>, vector<1x8x128xf32>
      %63 = vector.shape_cast %62 : vector<1x8x128xf32> to vector<8x128xf32>
      %64 = vector.shape_cast %61 : vector<8x128xf32> to vector<1x8x128xf32>
      tpu.vector_store %arg4[%c0_34, %c0_35, %c0_36], %64 {strides = array<i32>} : memref<1x8x128xf32, #tpu.memory_space<vmem>>, vector<1x8x128xf32>,
    } else {
    }
    return
  }
  func.func @transform_0(%arg0: i32, %arg1: i32) -> (i32, i32, i32) {
    %c0_i32 = arith.constant 0 : i32
    %c0_i32_0 = arith.constant 0 : i32
    return %arg0, %arg1, %c0_i32 : i32, i32, i32
  }
  func.func @transform_1(%arg0: i32, %arg1: i32) -> (i32, i32, i32) {
    %c0_i32 = arith.constant 0 : i32
    %c0_i32_0 = arith.constant 0 : i32
    return %arg0, %arg1, %c0_i32 : i32, i32, i32
  }
  func.func @transform_2(%arg0: i32, %arg1: i32) -> (i32, i32, i32) {
    %c0_i32 = arith.constant 0 : i32
    %c0_i32_0 = arith.constant 0 : i32
    %c0_i32_1 = arith.constant 0 : i32
    return %arg0, %c0_i32, %c0_i32_0 : i32, i32, i32
  }
}

</mosaic_0001>

<llo_original>
// kernel: pmd_loss_pallas.1
$region0: #{pmd_loss_pallas.1}
  #allocation0 [shape = 'u32[]', space=smem, size = 0x4, offset = 0x4, fixed_abs, tag = 'smem constant byte address 0x4 - core index']
  #allocation1 [shape = 'u32[144,128]{1,0:T(1,128)}', space=vmem, size = 0x12000, scoped, tag = 'internal scratch']
  #allocation2 [shape = 'f32[8,128]{1,0:T(8,128)}', space=vmem, size = 0x1000, scoped, tag = 'scratch operand']
  #allocation3 [shape = 'f32[8,128]{1,0:T(8,128)}', space=vmem, size = 0x1000, scoped, tag = 'scratch operand']
  %s0 = inlined_call_operand.vmem [shape: f32[2,8,128], index: 0, kind: input, shape index: {}]
  %s1 = inlined_call_operand.vmem [shape: f32[2,8,128], index: 1, kind: input, shape index: {}]
  %s2 = inlined_call_operand.vmem [shape: f32[2,8,128], index: 2, kind: output, shape index: {}]
  %s3 = sld [smem:[#allocation0]]
  $region49: #{pmd_loss_pallas.1} parent=0
    _
  %s5 = ssub.s32 1, %s3
  %s6 = scalar_select 0, %s5, %s3
  loop: start=0, step=1, limit=4
  $region2: #{pmd_loss_pallas.1} parent=0 // loop_pre_header
    _
  $region3: #{pmd_loss_pallas.1} parent=0 // loop_header
    %s8 = sphi 0, %s12
    %p9 = scmp.ge.s32.totalorder %s8, 4
    %s15 = sphi 0, %s27
    %s16 = sphi 0, %s23
    %s17 = sphi 0, %s15
    %s18 = sphi 0, %s16
    %s19 = sphi 0, %s17
    %s20 = sphi 0, %s18
    %s32 = sphi 0, %s34
    %s35 = sphi 0, %s32
    %s36 = sphi 0, %s35
    %s52 = sphi 0, %s36
    %s60 = sphi 0, %s62
    %s63 = sphi 0, %s60
    %s64 = sphi 0, %s63
    %s80 = sphi 0, %s64
    %s86 = sphi 0, %s88
    %s89 = sphi 0, %s86
    %s90 = sphi 0, %s89
    %s106 = sphi 0, %s90
  $region4: #{pmd_loss_pallas.1} parent=0 // loop_header_branch
    %11 = sbr.rel (%p9) target = $region8
  $region5: #{pmd_loss_pallas.1} parent=0 // loop_body
    %s13 = ssub.s32 %s8, 1
    %s14 = ssub.s32 %s8, 2
    %s21 = sadd.s32 1, %s16
    %p22 = scmp.ge.s32.totalorder %s21, 1
    %s23 = scalar_select %p22, 0, %s21
    %s24 = sadd.s32 1, %s15
    %s25 = scalar_select %p22, %s24, %s15
    %p26 = scmp.ge.s32.totalorder %s25, 2
    %s27 = scalar_select %p26, 0, %s25
    %s28 = ssub.s32 %s15, %s27
    %s29 = ssub.s32 %s16, %s23
    %s30 = sor.u32 %s28, %s29
    %p31 = scmp.eq.s32.totalorder %s30, 0
    %s33 = sadd.s32 %s32, 1
    %s34 = scalar_select %p31, %s32, %s33
    %p37 = pneg %p31
    %p38 = scmp.eq.s32.totalorder %s8, 1
    %p39 = por %p37, %p38
    %p40 = scmp.ne.s32.totalorder %s32, %s35
    %p41 = scmp.eq.s32.totalorder %s8, 0
    %p42 = por %p40, %p41
    %p43 = scmp.ne.s32.totalorder %s32, %s35
    %p44 = scmp.eq.s32.totalorder %s13, 1
    %p45 = por %p43, %p44
    %p46 = scmp.ne.s32.totalorder %s35, %s36
    %p47 = scmp.eq.s32.totalorder %s13, 0
    %p48 = por %p46, %p47
    %p49 = scmp.ne.s32.totalorder %s35, %s36
    %p50 = scmp.eq.s32.totalorder %s14, 1
    %p51 = por %p49, %p50
    %p53 = scmp.ne.s32.totalorder %s36, %s52
    %p54 = scmp.eq.s32.totalorder %s14, 0
    %p55 = por %p53, %p54
    %s56 = ssub.s32 %s15, %s27
    %s57 = ssub.s32 %s16, %s23
    %s58 = sor.u32 %s56, %s57
    %p59 = scmp.eq.s32.totalorder %s58, 0
    %s61 = sadd.s32 %s60, 1
    %s62 = scalar_select %p59, %s60, %s61
    %p65 = pneg %p59
    %p66 = scmp.eq.s32.totalorder %s8, 1
    %p67 = por %p65, %p66
    %p68 = scmp.ne.s32.totalorder %s60, %s63
    %p69 = scmp.eq.s32.totalorder %s8, 0
    %p70 = por %p68, %p69
    %p71 = scmp.ne.s32.totalorder %s60, %s63
    %p72 = scmp.eq.s32.totalorder %s13, 1
    %p73 = por %p71, %p72
    %p74 = scmp.ne.s32.totalorder %s63, %s64
    %p75 = scmp.eq.s32.totalorder %s13, 0
    %p76 = por %p74, %p75
    %p77 = scmp.ne.s32.totalorder %s63, %s64
    %p78 = scmp.eq.s32.totalorder %s14, 1
    %p79 = por %p77, %p78
    %p81 = scmp.ne.s32.totalorder %s64, %s80
    %p82 = scmp.eq.s32.totalorder %s14, 0
    %p83 = por %p81, %p82
    %s84 = ssub.s32 %s15, %s27
    %p85 = scmp.eq.s32.totalorder %s84, 0
    %s87 = sadd.s32 %s86, 1
    %s88 = scalar_select %p85, %s86, %s87
    %p91 = pneg %p85
    %p92 = scmp.eq.s32.totalorder %s8, 1
    %p93 = por %p91, %p92
    %p94 = scmp.ne.s32.totalorder %s86, %s89
    %p95 = scmp.eq.s32.totalorder %s8, 0
    %p96 = por %p94, %p95
    %p97 = scmp.ne.s32.totalorder %s86, %s89
    %p98 = scmp.eq.s32.totalorder %s13, 1
    %p99 = por %p97, %p98
    %p100 = scmp.ne.s32.totalorder %s89, %s90
    %p101 = scmp.eq.s32.totalorder %s13, 0
    %p102 = por %p100, %p101
    %p103 = scmp.ne.s32.totalorder %s89, %s90
    %p104 = scmp.eq.s32.totalorder %s14, 1
    %p105 = por %p103, %p104
    %p107 = scmp.ne.s32.totalorder %s90, %s106
    %p108 = scmp.eq.s32.totalorder %s14, 0
    %p109 = por %p107, %p108
    %p110 = scmp.le.s32.totalorder 1, %s8
    %p111 = scmp.lt.s32.totalorder %s8, 3
    %p112 = pnand %p110, %p111
    %p113 = pneg %p112
    // Predicated region
    $region9: #{pmd_loss_pallas.1} parent=5 // pred_check
      _
    $region10: #{pmd_loss_pallas.1} parent=5 // pred_check_branch
      %115 = sbr.rel (%p112) target = $region12
    $region11: #{pmd_loss_pallas.1} parent=5 // pred_region
      %s116 = ssub.s32 %s8, 1
    $region12: #{pmd_loss_pallas.1} parent=5 // pred_fallthru
      _
    %p117 = scmp.lt.s32.totalorder %s8, 2
    // Predicated region
    $region13: #{pmd_loss_pallas.1} parent=5 // pred_check
      %p118 = pneg %p117
    $region14: #{pmd_loss_pallas.1} parent=5 // pred_check_branch
      %120 = sbr.rel (%p118) target = $region16
    $region15: #{pmd_loss_pallas.1} parent=5 // pred_region
      // Predicated region
      $region17: #{pmd_loss_pallas.1} parent=15 // pred_check
        %p121 = pneg %p42
      $region18: #{pmd_loss_pallas.1} parent=15 // pred_check_branch
        %123 = sbr.rel (%p121) target = $region20
      $region19: #{pmd_loss_pallas.1} parent=15 // pred_region
        %p124 = scmp.lt.s32.totalorder %s15, 1
        %s125 = scalar_select %p124, %s15, 1
        %p126 = scmp.lt.s32.totalorder %s16, 0
        %s127 = scalar_select %p126, %s16, 0
        %s128 = sadd.s32 %s127, %s125
        %s129 = smul.addr %s128, 8
        %s130 = scalar_lea.vmem %s0, %s129
      $region20: #{pmd_loss_pallas.1} parent=15 // pred_fallthru
        _
      // Predicated region
      $region21: #{pmd_loss_pallas.1} parent=15 // pred_check
        %p131 = pneg %p70
      $region22: #{pmd_loss_pallas.1} parent=15 // pred_check_branch
        %133 = sbr.rel (%p131) target = $region24
      $region23: #{pmd_loss_pallas.1} parent=15 // pred_region
        %p134 = scmp.lt.s32.totalorder %s15, 1
        %s135 = scalar_select %p134, %s15, 1
        %p136 = scmp.lt.s32.totalorder %s16, 0
        %s137 = scalar_select %p136, %s16, 0
        %s138 = sadd.s32 %s137, %s135
        %s139 = smul.addr %s138, 8
        %s140 = scalar_lea.vmem %s1, %s139
      $region24: #{pmd_loss_pallas.1} parent=15 // pred_fallthru
        _
    $region16: #{pmd_loss_pallas.1} parent=5 // pred_fallthru
      _
    %p141 = scmp.le.s32.totalorder 1, %s8
    %p142 = scmp.lt.s32.totalorder %s8, 3
    %p143 = pnand %p141, %p142
    %p144 = pneg %p143
    // Predicated region
    $region25: #{pmd_loss_pallas.1} parent=5 // pred_check
      _
    $region26: #{pmd_loss_pallas.1} parent=5 // pred_check_branch
      %146 = sbr.rel (%p143) target = $region28
    $region27: #{pmd_loss_pallas.1} parent=5 // pred_region
      %s147 = ssub.s32 %s8, 1
      %p148 = scmp.lt.s32.totalorder %s17, 1
      %s149 = scalar_select %p148, %s17, 1
      %p150 = scmp.lt.s32.totalorder %s18, 0
      %s151 = scalar_select %p150, %s18, 0
      %s152 = sadd.s32 %s151, %s149
      %s153 = smul.addr %s152, 8
      %s154 = scalar_lea.vmem %s0, %s153
      %p155 = pneg %p48
      %p156 = pneg %p45
      %p157 = scmp.lt.s32.totalorder %s17, 1
      %s158 = scalar_select %p157, %s17, 1
      %p159 = scmp.lt.s32.totalorder %s18, 0
      %s160 = scalar_select %p159, %s18, 0
      %s161 = sadd.s32 %s160, %s158
      %s162 = smul.addr %s161, 8
      %s163 = scalar_lea.vmem %s1, %s162
      %p164 = pneg %p76
      %p165 = pneg %p73
      %p166 = pneg %p102
      %p167 = pneg %p99
      %p168 = scmp.lt.s32.totalorder %s17, 1
      %s169 = scalar_select %p168, %s17, 1
      %s170 = smul.addr %s169, 8
      %s171 = scalar_lea.vmem %s2, %s170
      %p172 = scmp.lt.s32.totalorder %s17, 1
      %s173 = scalar_select %p172, %s17, 1
      %p174 = scmp.lt.s32.totalorder %s18, 0
      %s175 = scalar_select %p174, %s18, 0
      %s176 = sadd.s32 %s175, %s173
      %s177 = smul.addr %s176, 8
      %s178 = scalar_lea.vmem %s0, %s177
      %p179 = scmp.lt.s32.totalorder %s17, 1
      %s180 = scalar_select %p179, %s17, 1
      %p181 = scmp.lt.s32.totalorder %s18, 0
      %s182 = scalar_select %p181, %s18, 0
      %s183 = sadd.s32 %s182, %s180
      %s184 = smul.addr %s183, 8
      %s185 = scalar_lea.vmem %s1, %s184
      %p186 = scmp.lt.s32.totalorder %s17, 1
      %s187 = scalar_select %p186, %s17, 1
      %s188 = smul.addr %s187, 8
      %s189 = scalar_lea.vmem %s2, %s188
      %p190 = scmp.eq.s32.totalorder %s18, 0
      // Predicated region
      $region29: #{pmd_loss_pallas.1} parent=27 // pred_check
        %p191 = pneg %p190
      $region30: #{pmd_loss_pallas.1} parent=27 // pred_check_branch
        %193 = sbr.rel (%p191) target = $region32
      $region31: #{pmd_loss_pallas.1} parent=27 // pred_region
        %194 = vst [vmem:[#allocation2] sm:$0xff] 0.0
        %195 = vst [vmem:[#allocation3] sm:$0xff] 0.0
      $region32: #{pmd_loss_pallas.1} parent=27 // pred_fallthru
        _
      %v196 = vld [vmem:[%s178] sm:$0xff]
      %v197 = vld [vmem:[%s185] sm:$0xff]
      %vm198 = vcmp.gt.f32.partialorder %v197, 0.0
      %v199 = vsel %vm198, 1.0, %v197
      %v200 = vmul.f32 %v196, %v199
      %v201 = vmin.f32 %v200, %v197
      %v202 = vadd.f32 %v201, 0.001
      %v203 = vmax.f32 %v200, %v197
      %v204 = vadd.f32 %v203, 0.001
      %v205 = vrcp.pop %v204
      %v206 = vmul.f32 %v202, %v205
      %vm207 = vcmp.lt.f32.partialorder %v206, 1.0
      %v208 = vlog2.pop %v206
      %v209 = vmul.f32 %v208, 0.6931472
      %v210 = vsub.f32 0.0, %v209
      %v211 = vsel %vm207, %v210, 0.0
      %v212 = vsel %vm207, 1.0, 0.0
      %v213 = vld [vmem:[#allocation2] sm:$0xff]
      %v214 = vadd.f32 %v211, 0.0
      %v215 = vadd.f32 %v213, %v214
      %216 = vst [vmem:[#allocation2] sm:$0xff] %v215
      %v217 = vld [vmem:[#allocation3] sm:$0xff]
      %v218 = vadd.f32 %v212, 0.0
      %v219 = vadd.f32 %v217, %v218
      %220 = vst [vmem:[#allocation3] sm:$0xff] %v219
      // Predicated region
      $region33: #{pmd_loss_pallas.1} parent=27 // pred_check
        %p221 = pneg %p190
      $region34: #{pmd_loss_pallas.1} parent=27 // pred_check_branch
        %223 = sbr.rel (%p221) target = $region36
      $region35: #{pmd_loss_pallas.1} parent=27 // pred_region
        %v224 = vld [vmem:[#allocation2] sm:$0xff]
        %225 = vadd.xlane.f32.xlu0 %v224
        %v226 = vpop.xlane.xlu0 %225
        %v227 = vrot.slane %v226, 4
        %v228 = vadd.f32 %v226, %v227
        %v229 = vrot.slane %v228, 2
        %v230 = vadd.f32 %v228, %v229
        %v231 = vrot.slane %v230, 1
        %v232 = vadd.f32 %v230, %v231
        %s233 = vtos %v232
        %v234 = vld [vmem:[#allocation3] sm:$0xff]
        %235 = vadd.xlane.f32.xlu0 %v234
        %v236 = vpop.xlane.xlu0 %235
        %v237 = vrot.slane %v236, 4
        %v238 = vadd.f32 %v236, %v237
        %v239 = vrot.slane %v238, 2
        %v240 = vadd.f32 %v238, %v239
        %v241 = vrot.slane %v240, 1
        %v242 = vadd.f32 %v240, %v241
        %s243 = vtos %v242
        %v244 = vlaneseq
        %v245 = vshrl.u32 %v244, 7
        %vm246 = vcmp.eq.s32.totalorder %v245, 0
        %vm247 = vcmp.eq.s32.totalorder %v245, 1
        %v248 = vstv %s243
        %v249 = vsel %vm247, %v248, 0.0
        %v250 = vstv %s233
        %v251 = vsel %vm246, %v250, %v249
        %252 = vst [vmem:[%s189] sm:$0xff] %v251
      $region36: #{pmd_loss_pallas.1} parent=27 // pred_fallthru
        _
      %p253 = scmp.lt.s32.totalorder %s17, 1
      %s254 = scalar_select %p253, %s17, 1
      %s255 = smul.addr %s254, 8
      %s256 = scalar_lea.vmem %s2, %s255
      // Predicated region
      $region37: #{pmd_loss_pallas.1} parent=27 // pred_check
        %p257 = pneg %p99
      $region38: #{pmd_loss_pallas.1} parent=27 // pred_check_branch
        %259 = sbr.rel (%p257) target = $region40
      $region39: #{pmd_loss_pallas.1} parent=27 // pred_region
        _
      $region40: #{pmd_loss_pallas.1} parent=27 // pred_fallthru
        _
    $region28: #{pmd_loss_pallas.1} parent=5 // pred_fallthru
      _
    %p260 = scmp.le.s32.totalorder 2, %s8
    // Predicated region
    $region41: #{pmd_loss_pallas.1} parent=5 // pred_check
      %p261 = pneg %p260
    $region42: #{pmd_loss_pallas.1} parent=5 // pred_check_branch
      %263 = sbr.rel (%p261) target = $region44
    $region43: #{pmd_loss_pallas.1} parent=5 // pred_region
      %s264 = ssub.s32 %s8, 2
      // Predicated region
      $region45: #{pmd_loss_pallas.1} parent=43 // pred_check
        %p265 = pneg %p105
      $region46: #{pmd_loss_pallas.1} parent=43 // pred_check_branch
        %267 = sbr.rel (%p265) target = $region48
      $region47: #{pmd_loss_pallas.1} parent=43 // pred_region
        %p268 = scmp.lt.s32.totalorder %s19, 1
        %s269 = scalar_select %p268, %s19, 1
        %s270 = smul.addr %s269, 8
        %s271 = scalar_lea.vmem %s2, %s270
      $region48: #{pmd_loss_pallas.1} parent=43 // pred_fallthru
        _
    $region44: #{pmd_loss_pallas.1} parent=5 // pred_fallthru
      _
  $region6: #{pmd_loss_pallas.1} parent=0 // loop_footer
    %s12 = sadd.s32 1, %s8
  $region7: #{pmd_loss_pallas.1} parent=0 // loop_footer_branch
    %7 = sbr.rel target = $region3
  $region8: #{pmd_loss_pallas.1} parent=0 // loop_exit
    _

</llo_original>
